<compile_context>
chip_gen: v5e
topology: v5e:2x2
jax: 0.10.0
libtpu: 0.0.40
codegen_flags: <defaults>
</compile_context>

<pallas_src>
import functools

import jax
import jax.numpy as jnp
from jax import lax
from jax.experimental import pallas as pl
from jax.experimental.pallas import tpu as pltpu

_LANES = 128
_SUBLANES = 8


def _dice_kernel(p_ref, t_ref, out_ref, num_acc, den_acc, *,
                 smooth, p_exp, rows_valid, rows_per_block, need_mask):
    j = pl.program_id(1)
    last = pl.num_programs(1) - 1

    @pl.when(j == 0)
    def _():
        num_acc[...] = jnp.zeros_like(num_acc)
        den_acc[...] = jnp.zeros_like(den_acc)

    def accumulate(masked):
        p = p_ref[...].astype(jnp.float32)      # (rows_per_block, 128)
        t = t_ref[...].astype(jnp.float32)
        if masked:
            # Zero the undefined rows of the partial tail block BEFORE any
            # arithmetic (valid for p_exp > 0; guarded in the wrapper).
            row = lax.broadcasted_iota(jnp.int32, p.shape, 0) + j * rows_per_block
            valid = row < rows_valid
            zero = jnp.zeros_like(p)
            p = jnp.where(valid, p, zero)
            t = jnp.where(valid, t, zero)
        prod = p * t
        if p_exp == 2:
            dterm = p * p + t * t
        elif p_exp == 1:
            dterm = p + t
        else:
            dterm = p ** p_exp + t ** p_exp
        nsub = rows_per_block // _SUBLANES
        # Fold the whole tile into a single-vreg accumulator: reshape is
        # vreg-boundary aligned, axis-0 sum is plain cross-vreg VPU adds.
        num_acc[...] += prod.reshape(nsub, _SUBLANES, _LANES).sum(axis=0)
        den_acc[...] += dterm.reshape(nsub, _SUBLANES, _LANES).sum(axis=0)

    if need_mask:
        @pl.when(j < last)
        def _():
            accumulate(False)

        @pl.when(j == last)
        def _():
            accumulate(True)
    else:
        accumulate(False)

    @pl.when(j == last)
    def _():
        num = jnp.sum(num_acc[...]) + smooth
        den = jnp.sum(den_acc[...]) + smooth
        loss = 1.0 - num / den
        out_ref[...] = jnp.full(out_ref.shape, loss, dtype=out_ref.dtype)


def dice_loss(predict, target, smooth=1.0, p_exp=2, reduction="mean",
              block_rows=8192):
    """Pallas implementation of DiceLoss.forward (any reduction mode)."""
    assert predict.shape[0] == target.shape[0], \
        "predict & target batch size don't match"
    B = predict.shape[0]
    pred2d = predict.reshape(B, -1)
    targ2d = target.reshape(B, -1)
    N = pred2d.shape[1]

    padded = False
    if N % _LANES != 0:
        # TODO(synk): replace this host-side lane pad with a manual-DMA path
        # that masks the ragged lane tail in-kernel (saves an HBM round trip
        # for odd-N shapes).
        pad = (-N) % _LANES
        pred2d = jnp.pad(pred2d, ((0, 0), (0, pad)))
        targ2d = jnp.pad(targ2d, ((0, 0), (0, pad)))
        padded = True
    R = pred2d.shape[1] // _LANES
    pred3d = pred2d.reshape(B, R, _LANES)       # free reshape, row-major
    targ3d = targ2d.reshape(B, R, _LANES)

    # Sublane alignment depends on dtype packing (f32 -> 8, bf16 -> 16, ...).
    min_itemsize = min(pred3d.dtype.itemsize, targ3d.dtype.itemsize)
    row_align = _SUBLANES * max(1, 4 // max(1, min_itemsize))

    if R < row_align:
        # Tiny feature count: pad rows up to one packed tile (negligible copy).
        rp = row_align - R
        pred3d = jnp.pad(pred3d, ((0, 0), (0, rp), (0, 0)))
        targ3d = jnp.pad(targ3d, ((0, 0), (0, rp), (0, 0)))
        padded = True
    R_slab = pred3d.shape[1]

    st_cap = max(row_align, (block_rows // row_align) * row_align)
    st = min(st_cap, (R_slab // row_align) * row_align)
    n_chunks = pl.cdiv(R_slab, st)
    need_mask = (R_slab % st) != 0

    if p_exp <= 0 and (padded or need_mask):
        raise ValueError(
            "p_exp must be > 0 when the flattened feature size requires "
            "padding/masking (0**0 would add spurious denominator terms)")

    kernel = functools.partial(
        _dice_kernel, smooth=float(smooth), p_exp=p_exp,
        rows_valid=R_slab, rows_per_block=st, need_mask=need_mask)

    bytes_accessed = (B * R_slab * _LANES
                      * (pred3d.dtype.itemsize + targ3d.dtype.itemsize)
                      + B * _LANES * 4)
    cost = pl.CostEstimate(flops=6 * B * R_slab * _LANES,
                           transcendentals=0,
                           bytes_accessed=bytes_accessed)

    out = pl.pallas_call(
        kernel,
        out_shape=jax.ShapeDtypeStruct((B, 1, _LANES), jnp.float32),
        grid_spec=pltpu.PrefetchScalarGridSpec(
            num_scalar_prefetch=0,
            grid=(B, n_chunks),
            in_specs=[
                pl.BlockSpec((None, st, _LANES), lambda b, j: (b, j, 0)),
                pl.BlockSpec((None, st, _LANES), lambda b, j: (b, j, 0)),
            ],
            out_specs=pl.BlockSpec((None, 1, _LANES), lambda b, j: (b, 0, 0)),
            scratch_shapes=[
                pltpu.VMEM((_SUBLANES, _LANES), jnp.float32),   # num partials
                pltpu.VMEM((_SUBLANES, _LANES), jnp.float32),   # den partials
            ],
        ),
        compiler_params=pltpu.CompilerParams(
            dimension_semantics=("parallel", "arbitrary"),
            vmem_limit_bytes=32 * 1024 * 1024,
        ),
        cost_estimate=cost,
    )(pred3d, targ3d)

    per_sample = out[:, 0, 0]                   # (B,) per-sample dice loss
    if reduction == "mean":
        return jnp.mean(per_sample)
    elif reduction == "sum":
        return jnp.sum(per_sample)
    elif reduction == "none":
        return per_sample
    else:
        raise ValueError(f"Unexpected reduction {reduction}")


def dice_loss_ref(predict, target, smooth=1.0, p_exp=2, reduction="mean"):
    B = predict.shape[0]
    pr = predict.reshape(B, -1).astype(jnp.float32)
    tg = target.reshape(B, -1).astype(jnp.float32)
    num = jnp.sum(pr * tg, axis=1) + smooth
    den = jnp.sum(pr ** p_exp + tg ** p_exp, axis=1) + smooth
    loss = 1.0 - num / den
    if reduction == "mean":
        return jnp.mean(loss)
    if reduction == "sum":
        return jnp.sum(loss)
    return loss


if __name__ == "__main__":
    key = jax.random.PRNGKey(0)
    k1, k2, k3, k4 = jax.random.split(key, 4)

    # Case 1: NCHW, N multiple of 128, single chunk, mean reduction.
    B, C, H, W = 2, 4, 16, 16
    predict = jax.nn.sigmoid(jax.random.normal(k1, (B, C, H, W), jnp.float32))
    target = (jax.random.uniform(k2, (B, C, H, W)) > 0.5).astype(jnp.float32)
    out1 = jax.block_until_ready(dice_loss(predict, target, smooth=1.0, p_exp=2))
    ref1 = dice_loss_ref(predict, target, smooth=1.0, p_exp=2)
    assert jnp.allclose(out1, ref1, atol=1e-5, rtol=1e-5), (out1, ref1)

    # Case 2: multi-chunk streaming with a masked ragged row tail
    # (R=18 rows, small block_rows -> st=8, 3 chunks, last one partial).
    B2, C2, H2, W2 = 2, 4, 24, 24
    p2 = jax.nn.sigmoid(jax.random.normal(k3, (B2, C2, H2, W2), jnp.float32))
    t2 = (jax.random.uniform(k4, (B2, C2, H2, W2)) > 0.5).astype(jnp.float32)
    out2 = jax.block_until_ready(
        dice_loss(p2, t2, smooth=1.0, p_exp=2, reduction="none", block_rows=8))
    ref2 = dice_loss_ref(p2, t2, reduction="none")
    assert jnp.allclose(out2, ref2, atol=1e-5, rtol=1e-5), (out2, ref2)

    # Case 3: feature size not a multiple of 128 (lane pad path) with bf16
    # inputs kept in bf16 all the way to HBM; f32 accumulation in-kernel.
    B3, C3, H3, W3 = 2, 3, 10, 13
    p3 = jax.nn.sigmoid(
        jax.random.normal(k1, (B3, C3, H3, W3), jnp.float32)).astype(jnp.bfloat16)
    t3 = (jax.random.uniform(k2, (B3, C3, H3, W3)) > 0.5).astype(jnp.bfloat16)
    out3 = jax.block_until_ready(dice_loss(p3, t3, reduction="sum"))
    ref3 = dice_loss_ref(p3, t3, reduction="sum")
    assert jnp.allclose(out3, ref3, atol=1e-4, rtol=1e-4), (out3, ref3)

    print("KERNEL_OK")
</pallas_src>

<mosaic_0001>
module attributes {stable_mosaic.version = 11 : i64} {
  func.func @_dice_kernel(%arg0: i32, %arg1: i32, %arg2: memref<1x8x128xf32, #tpu.memory_space<vmem>>, %arg3: memref<1x8x128xf32, #tpu.memory_space<vmem>>, %arg4: memref<1x1x128xf32, #tpu.memory_space<vmem>>, %arg5: memref<8x128xf32, #tpu.memory_space<vmem>>, %arg6: memref<8x128xf32, #tpu.memory_space<vmem>>) attributes {dimension_semantics = [#tpu.dimension_semantics<parallel>, #tpu.dimension_semantics<arbitrary>], iteration_bounds = array<i64: 2, 1>, scalar_prefetch = 0 : i64, scratch_operands = 2 : i64, tpu.core_type = #tpu.core_type<tc>, window_params = [{transform_indices = @transform_0, window_bounds = array<i64: 1, 8, 128>}, {transform_indices = @transform_1, window_bounds = array<i64: 1, 8, 128>}, {transform_indices = @transform_2, window_bounds = array<i64: 1, 1, 128>}]} {
    %c0_i32 = arith.constant 0 : i32
    %0 = arith.cmpi eq, %arg1, %c0_i32 : i32
    %1 = arith.extui %0 : i1 to i32
    %c0_i32_0 = arith.constant 0 : i32
    %2 = arith.cmpi ne, %1, %c0_i32_0 : i32
    scf.if %2 {
      %cst_17 = arith.constant 0.000000e+00 : f32
      %24 = vector.broadcast %cst_17 : f32 to vector<8x128xf32>
      %c0_18 = arith.constant 0 : index
      %c0_19 = arith.constant 0 : index
      %25 = vector.load %arg5[%c0_18, %c0_19] : memref<8x128xf32, #tpu.memory_space<vmem>>, vector<8x128xf32>
      tpu.vector_store %arg5[%c0_18, %c0_19], %24 {strides = array<i32>} : memref<8x128xf32, #tpu.memory_space<vmem>>, vector<8x128xf32>,
      %cst_20 = arith.constant 0.000000e+00 : f32
      %26 = vector.broadcast %cst_20 : f32 to vector<8x128xf32>
      %c0_21 = arith.constant 0 : index
      %c0_22 = arith.constant 0 : index
      %27 = vector.load %arg6[%c0_21, %c0_22] : memref<8x128xf32, #tpu.memory_space<vmem>>, vector<8x128xf32>
      tpu.vector_store %arg6[%c0_21, %c0_22], %26 {strides = array<i32>} : memref<8x128xf32, #tpu.memory_space<vmem>>, vector<8x128xf32>,
    } else {
    }
    %c0 = arith.constant 0 : index
    %c0_1 = arith.constant 0 : index
    %c0_2 = arith.constant 0 : index
    %3 = vector.load %arg2[%c0, %c0_1, %c0_2] : memref<1x8x128xf32, #tpu.memory_space<vmem>>, vector<1x8x128xf32>
    %4 = vector.shape_cast %3 : vector<1x8x128xf32> to vector<8x128xf32>
    %c0_3 = arith.constant 0 : index
    %c0_4 = arith.constant 0 : index
    %c0_5 = arith.constant 0 : index
    %5 = vector.load %arg3[%c0_3, %c0_4, %c0_5] : memref<1x8x128xf32, #tpu.memory_space<vmem>>, vector<1x8x128xf32>
    %6 = vector.shape_cast %5 : vector<1x8x128xf32> to vector<8x128xf32>
    %7 = arith.mulf %4, %6 : vector<8x128xf32>
    %8 = arith.mulf %4, %4 : vector<8x128xf32>
    %9 = arith.mulf %6, %6 : vector<8x128xf32>
    %10 = arith.addf %8, %9 : vector<8x128xf32>
    %c0_6 = arith.constant 0 : index
    %c0_7 = arith.constant 0 : index
    %11 = vector.load %arg5[%c0_6, %c0_7] : memref<8x128xf32, #tpu.memory_space<vmem>>, vector<8x128xf32>
    %12 = vector.shape_cast %7 : vector<8x128xf32> to vector<1x8x128xf32>
    %cst = arith.constant dense<0.000000e+00> : vector<8x128xf32>
    %13 = vector.multi_reduction <add>, %12, %cst [0] : vector<1x8x128xf32> to vector<8x128xf32>
    %14 = arith.addf %11, %13 : vector<8x128xf32>
    %c0_8 = arith.constant 0 : index
    %c0_9 = arith.constant 0 : index
    %15 = vector.load %arg5[%c0_8, %c0_9] : memref<8x128xf32, #tpu.memory_space<vmem>>, vector<8x128xf32>
    tpu.vector_store %arg5[%c0_8, %c0_9], %14 {strides = array<i32>} : memref<8x128xf32, #tpu.memory_space<vmem>>, vector<8x128xf32>,
    %c0_10 = arith.constant 0 : index
    %c0_11 = arith.constant 0 : index
    %16 = vector.load %arg6[%c0_10, %c0_11] : memref<8x128xf32, #tpu.memory_space<vmem>>, vector<8x128xf32>
    %17 = vector.shape_cast %10 : vector<8x128xf32> to vector<1x8x128xf32>
    %cst_12 = arith.constant dense<0.000000e+00> : vector<8x128xf32>
    %18 = vector.multi_reduction <add>, %17, %cst_12 [0] : vector<1x8x128xf32> to vector<8x128xf32>
    %19 = arith.addf %16, %18 : vector<8x128xf32>
    %c0_13 = arith.constant 0 : index
    %c0_14 = arith.constant 0 : index
    %20 = vector.load %arg6[%c0_13, %c0_14] : memref<8x128xf32, #tpu.memory_space<vmem>>, vector<8x128xf32>
    tpu.vector_store %arg6[%c0_13, %c0_14], %19 {strides = array<i32>} : memref<8x128xf32, #tpu.memory_space<vmem>>, vector<8x128xf32>,
    %c0_i32_15 = arith.constant 0 : i32
    %21 = arith.cmpi eq, %arg1, %c0_i32_15 : i32
    %22 = arith.extui %21 : i1 to i32
    %c0_i32_16 = arith.constant 0 : i32
    %23 = arith.cmpi ne, %22, %c0_i32_16 : i32
    scf.if %23 {
      %c0_17 = arith.constant 0 : index
      %c0_18 = arith.constant 0 : index
      %24 = vector.load %arg5[%c0_17, %c0_18] : memref<8x128xf32, #tpu.memory_space<vmem>>, vector<8x128xf32>
      %25 = vector.shape_cast %24 : vector<8x128xf32> to vector<1x8x128xf32>
      %cst_19 = arith.constant dense<0.000000e+00> : vector<1xf32>
      %26 = vector.multi_reduction <add>, %25, %cst_19 [1, 2] : vector<1x8x128xf32> to vector<1xf32>
      %27 = vector.shape_cast %26 : vector<1xf32> to vector<1x1x1xf32>
      %28 = vector.extract %27[0, 0, 0] : f32 from vector<1x1x1xf32>
      %cst_20 = arith.constant 1.000000e+00 : f32
      %29 = arith.addf %28, %cst_20 : f32
      %c0_21 = arith.constant 0 : index
      %c0_22 = arith.constant 0 : index
      %30 = vector.load %arg6[%c0_21, %c0_22] : memref<8x128xf32, #tpu.memory_space<vmem>>, vector<8x128xf32>
      %31 = vector.shape_cast %30 : vector<8x128xf32> to vector<1x8x128xf32>
      %cst_23 = arith.constant dense<0.000000e+00> : vector<1xf32>
      %32 = vector.multi_reduction <add>, %31, %cst_23 [1, 2] : vector<1x8x128xf32> to vector<1xf32>
      %33 = vector.shape_cast %32 : vector<1xf32> to vector<1x1x1xf32>
      %34 = vector.extract %33[0, 0, 0] : f32 from vector<1x1x1xf32>
      %cst_24 = arith.constant 1.000000e+00 : f32
      %35 = arith.addf %34, %cst_24 : f32
      %36 = arith.divf %29, %35 : f32
      %cst_25 = arith.constant 1.000000e+00 : f32
      %37 = arith.subf %cst_25, %36 : f32
      %38 = vector.broadcast %37 : f32 to vector<1x128xf32>
      %c0_26 = arith.constant 0 : index
      %c0_27 = arith.constant 0 : index
      %c0_28 = arith.constant 0 : index
      %39 = vector.load %arg4[%c0_26, %c0_27, %c0_28] : memref<1x1x128xf32, #tpu.memory_space<vmem>>, vector<1x1x128xf32>
      %40 = vector.shape_cast %39 : vector<1x1x128xf32> to vector<1x128xf32>
      %41 = vector.shape_cast %38 : vector<1x128xf32> to vector<1x1x128xf32>
      tpu.vector_store %arg4[%c0_26, %c0_27, %c0_28], %41 {strides = array<i32>} : memref<1x1x128xf32, #tpu.memory_space<vmem>>, vector<1x1x128xf32>,
    } else {
    }
    return
  }
  func.func @transform_0(%arg0: i32, %arg1: i32) -> (i32, i32, i32) {
    %c0_i32 = arith.constant 0 : i32
    %c0_i32_0 = arith.constant 0 : i32
    return %arg0, %arg1, %c0_i32 : i32, i32, i32
  }
  func.func @transform_1(%arg0: i32, %arg1: i32) -> (i32, i32, i32) {
    %c0_i32 = arith.constant 0 : i32
    %c0_i32_0 = arith.constant 0 : i32
    return %arg0, %arg1, %c0_i32 : i32, i32, i32
  }
  func.func @transform_2(%arg0: i32, %arg1: i32) -> (i32, i32, i32) {
    %c0_i32 = arith.constant 0 : i32
    %c0_i32_0 = arith.constant 0 : i32
    %c0_i32_1 = arith.constant 0 : i32
    return %arg0, %c0_i32, %c0_i32_0 : i32, i32, i32
  }
}

</mosaic_0001>

<llo_original>
// kernel: tpu_custom_call.1
$region0: #{tpu_custom_call.1}
  #allocation0 [shape = 'u32[]', space=smem, size = 0x4, offset = 0x4, fixed_abs, tag = 'smem constant byte address 0x4 - core index']
  #allocation1 [shape = 'u32[72,128]{1,0:T(1,128)}', space=vmem, size = 0x9000, scoped, tag = 'internal scratch']
  #allocation2 [shape = 'f32[8,128]{1,0:T(8,128)}', space=vmem, size = 0x1000, scoped, tag = 'scratch operand']
  #allocation3 [shape = 'f32[8,128]{1,0:T(8,128)}', space=vmem, size = 0x1000, scoped, tag = 'scratch operand']
  %s0 = inlined_call_operand.hbm [shape: f32[2,8,128], index: 0, kind: input, shape index: {}]
  %s1 = inlined_call_operand.hbm [shape: f32[2,8,128], index: 1, kind: input, shape index: {}]
  %s2 = inlined_call_operand.hbm [shape: f32[2,1,128], index: 2, kind: output, shape index: {}]
  %s3 = sld [smem:[#allocation0]]
  $region57: #{tpu_custom_call.1} parent=0
    _
  %s5 = ssub.s32 1, %s3
  %s6 = scalar_select 0, %s5, %s3
  $region1: #{tpu_custom_call.1} parent=0
    #allocation4 [shape = 'u8[8192]{0}', space=vmem, size = 0x2000, scoped, tag = 'input window, operand 0']
    #allocation5 [shape = 's32[2]{0}', space=sflag, size = 0x8, scoped, tag = 'scoped memory for tpu_custom_call.1']
    #allocation6 [shape = 's32[2]{0}', space=sflag, size = 0x8, scoped, tag = 'scoped memory for tpu_custom_call.1']
    #allocation7 [shape = 'u8[8192]{0}', space=vmem, size = 0x2000, scoped, tag = 'input window, operand 1']
    #allocation8 [shape = 's32[2]{0}', space=sflag, size = 0x8, scoped, tag = 'scoped memory for tpu_custom_call.1']
    #allocation9 [shape = 'u8[1024]{0}', space=vmem, size = 0x400, scoped, tag = 'output window, operand 0']
    %7 = vsyncpa [#allocation5], 0
    %s8 = scalar_lea.sflag [#allocation5], 1
    %9 = vsyncpa %s8, 0
    %10 = vsyncpa [#allocation8], 0
    %s11 = scalar_lea.sflag [#allocation8], 1
    %12 = vsyncpa %s11, 0
    %13 = vsyncpa [#allocation6], 0
    %s14 = scalar_lea.sflag [#allocation6], 1
    %15 = vsyncpa %s14, 0
    loop: start=0, step=1, limit=4
    $region2: #{tpu_custom_call.1} parent=1 // loop_pre_header
      _
    $region3: #{tpu_custom_call.1} parent=1 // loop_header
      %s17 = sphi 0, %s21
      %p18 = scmp.ge.s32.totalorder %s17, 4
      %s24 = sphi 0, %s36
      %s25 = sphi 0, %s32
      %s26 = sphi 0, %s24
      %s27 = sphi 0, %s25
      %s28 = sphi 0, %s26
      %s29 = sphi 0, %s27
      %s41 = sphi 0, %s43
      %s44 = sphi 0, %s41
      %s45 = sphi 0, %s44
      %s61 = sphi 0, %s45
      %s69 = sphi 0, %s71
      %s72 = sphi 0, %s69
      %s73 = sphi 0, %s72
      %s89 = sphi 0, %s73
      %s95 = sphi 0, %s97
      %s98 = sphi 0, %s95
      %s99 = sphi 0, %s98
      %s115 = sphi 0, %s99
    $region4: #{tpu_custom_call.1} parent=1 // loop_header_branch
      %20 = sbr.rel (%p18) target = $region8
    $region5: #{tpu_custom_call.1} parent=1 // loop_body
      %s22 = ssub.s32 %s17, 1
      %s23 = ssub.s32 %s17, 2
      %s30 = sadd.s32 1, %s25
      %p31 = scmp.ge.s32.totalorder %s30, 1
      %s32 = scalar_select %p31, 0, %s30
      %s33 = sadd.s32 1, %s24
      %s34 = scalar_select %p31, %s33, %s24
      %p35 = scmp.ge.s32.totalorder %s34, 2
      %s36 = scalar_select %p35, 0, %s34
      %s37 = ssub.s32 %s24, %s36
      %s38 = ssub.s32 %s25, %s32
      %s39 = sor.u32 %s37, %s38
      %p40 = scmp.eq.s32.totalorder %s39, 0
      %s42 = sadd.s32 %s41, 1
      %s43 = scalar_select %p40, %s41, %s42
      %p46 = pneg %p40
      %p47 = scmp.eq.s32.totalorder %s17, 1
      %p48 = por %p46, %p47
      %p49 = scmp.ne.s32.totalorder %s41, %s44
      %p50 = scmp.eq.s32.totalorder %s17, 0
      %p51 = por %p49, %p50
      %p52 = scmp.ne.s32.totalorder %s41, %s44
      %p53 = scmp.eq.s32.totalorder %s22, 1
      %p54 = por %p52, %p53
      %p55 = scmp.ne.s32.totalorder %s44, %s45
      %p56 = scmp.eq.s32.totalorder %s22, 0
      %p57 = por %p55, %p56
      %p58 = scmp.ne.s32.totalorder %s44, %s45
      %p59 = scmp.eq.s32.totalorder %s23, 1
      %p60 = por %p58, %p59
      %p62 = scmp.ne.s32.totalorder %s45, %s61
      %p63 = scmp.eq.s32.totalorder %s23, 0
      %p64 = por %p62, %p63
      %s65 = ssub.s32 %s24, %s36
      %s66 = ssub.s32 %s25, %s32
      %s67 = sor.u32 %s65, %s66
      %p68 = scmp.eq.s32.totalorder %s67, 0
      %s70 = sadd.s32 %s69, 1
      %s71 = scalar_select %p68, %s69, %s70
      %p74 = pneg %p68
      %p75 = scmp.eq.s32.totalorder %s17, 1
      %p76 = por %p74, %p75
      %p77 = scmp.ne.s32.totalorder %s69, %s72
      %p78 = scmp.eq.s32.totalorder %s17, 0
      %p79 = por %p77, %p78
      %p80 = scmp.ne.s32.totalorder %s69, %s72
      %p81 = scmp.eq.s32.totalorder %s22, 1
      %p82 = por %p80, %p81
      %p83 = scmp.ne.s32.totalorder %s72, %s73
      %p84 = scmp.eq.s32.totalorder %s22, 0
      %p85 = por %p83, %p84
      %p86 = scmp.ne.s32.totalorder %s72, %s73
      %p87 = scmp.eq.s32.totalorder %s23, 1
      %p88 = por %p86, %p87
      %p90 = scmp.ne.s32.totalorder %s73, %s89
      %p91 = scmp.eq.s32.totalorder %s23, 0
      %p92 = por %p90, %p91
      %s93 = ssub.s32 %s24, %s36
      %p94 = scmp.eq.s32.totalorder %s93, 0
      %s96 = sadd.s32 %s95, 1
      %s97 = scalar_select %p94, %s95, %s96
      %p100 = pneg %p94
      %p101 = scmp.eq.s32.totalorder %s17, 1
      %p102 = por %p100, %p101
      %p103 = scmp.ne.s32.totalorder %s95, %s98
      %p104 = scmp.eq.s32.totalorder %s17, 0
      %p105 = por %p103, %p104
      %p106 = scmp.ne.s32.totalorder %s95, %s98
      %p107 = scmp.eq.s32.totalorder %s22, 1
      %p108 = por %p106, %p107
      %p109 = scmp.ne.s32.totalorder %s98, %s99
      %p110 = scmp.eq.s32.totalorder %s22, 0
      %p111 = por %p109, %p110
      %p112 = scmp.ne.s32.totalorder %s98, %s99
      %p113 = scmp.eq.s32.totalorder %s23, 1
      %p114 = por %p112, %p113
      %p116 = scmp.ne.s32.totalorder %s99, %s115
      %p117 = scmp.eq.s32.totalorder %s23, 0
      %p118 = por %p116, %p117
      %p119 = scmp.le.s32.totalorder 1, %s17
      %p120 = scmp.lt.s32.totalorder %s17, 3
      %p121 = pnand %p119, %p120
      %p122 = pneg %p121
      // Predicated region
      $region9: #{tpu_custom_call.1} parent=5 // pred_check
        _
      $region10: #{tpu_custom_call.1} parent=5 // pred_check_branch
        %124 = sbr.rel (%p121) target = $region12
      $region11: #{tpu_custom_call.1} parent=5 // pred_region
        %s125 = ssub.s32 %s17, 1
      $region12: #{tpu_custom_call.1} parent=5 // pred_fallthru
        _
      %p126 = scmp.lt.s32.totalorder %s17, 2
      // Predicated region
      $region13: #{tpu_custom_call.1} parent=5 // pred_check
        %p127 = pneg %p126
      $region14: #{tpu_custom_call.1} parent=5 // pred_check_branch
        %129 = sbr.rel (%p127) target = $region16
      $region15: #{tpu_custom_call.1} parent=5 // pred_region
        // Predicated region
        $region17: #{tpu_custom_call.1} parent=15 // pred_check
          %p130 = pneg %p51
        $region18: #{tpu_custom_call.1} parent=15 // pred_check_branch
          %132 = sbr.rel (%p130) target = $region20
        $region19: #{tpu_custom_call.1} parent=15 // pred_region
          %s133 = sand.u32 %s41, 1
          %s134 = scalar_lea.sflag [#allocation5], %s133
          %s135 = sand.u32 %s41, 1
          %s136 = smul.addr %s135, 8
          %s137 = scalar_lea.vmem [#allocation4], %s136
          %139 = vsyncadd %s134, 0
          %s140 = sadd.s32 %s25, %s24
          %s141 = smul.addr %s140, 8
          %s142 = scalar_lea.hbm %s0, %s141
          %s144 = sshll.u32 %s142, 4
          %s145 = int_to_ptr.hbm [resolvable:$true] %s144
          %s146 = sshll.u32 %s137, 4
          %s147 = int_to_ptr.vmem [resolvable:$true] %s146
          %149 = dma.hbm_to_vmem [thread:$0]  %s145, 128, %s147, %s134
        $region20: #{tpu_custom_call.1} parent=15 // pred_fallthru
          _
        // Predicated region
        $region21: #{tpu_custom_call.1} parent=15 // pred_check
          %p150 = pneg %p79
        $region22: #{tpu_custom_call.1} parent=15 // pred_check_branch
          %152 = sbr.rel (%p150) target = $region24
        $region23: #{tpu_custom_call.1} parent=15 // pred_region
          %s153 = sand.u32 %s69, 1
          %s154 = scalar_lea.sflag [#allocation8], %s153
          %s155 = sand.u32 %s69, 1
          %s156 = smul.addr %s155, 8
          %s157 = scalar_lea.vmem [#allocation7], %s156
          %159 = vsyncadd %s154, 0
          %s160 = sadd.s32 %s25, %s24
          %s161 = smul.addr %s160, 8
          %s162 = scalar_lea.hbm %s1, %s161
          %s164 = sshll.u32 %s162, 4
          %s165 = int_to_ptr.hbm [resolvable:$true] %s164
          %s166 = sshll.u32 %s157, 4
          %s167 = int_to_ptr.vmem [resolvable:$true] %s166
          %169 = dma.hbm_to_vmem [thread:$0]  %s165, 128, %s167, %s154
        $region24: #{tpu_custom_call.1} parent=15 // pred_fallthru
          _
      $region16: #{tpu_custom_call.1} parent=5 // pred_fallthru
        _
      %p170 = scmp.le.s32.totalorder 1, %s17
      %p171 = scmp.lt.s32.totalorder %s17, 3
      %p172 = pnand %p170, %p171
      %p173 = pneg %p172
      // Predicated region
      $region25: #{tpu_custom_call.1} parent=5 // pred_check
        _
      $region26: #{tpu_custom_call.1} parent=5 // pred_check_branch
        %175 = sbr.rel (%p172) target = $region28
      $region27: #{tpu_custom_call.1} parent=5 // pred_region
        %s176 = ssub.s32 %s17, 1
        %s177 = sand.u32 %s44, 1
        %s178 = scalar_lea.sflag [#allocation5], %s177
        %s179 = sand.u32 %s44, 1
        %s180 = smul.addr %s179, 8
        %s181 = scalar_lea.vmem [#allocation4], %s180
        // Predicated region
        $region29: #{tpu_custom_call.1} parent=27 // pred_check
          %p182 = pneg %p57
        $region30: #{tpu_custom_call.1} parent=27 // pred_check_branch
          %184 = sbr.rel (%p182) target = $region32
        $region31: #{tpu_custom_call.1} parent=27 // pred_region
          %186 = dma.done %s178, 128
        $region32: #{tpu_custom_call.1} parent=27 // pred_fallthru
          _
        %s187 = sand.u32 %s72, 1
        %s188 = scalar_lea.sflag [#allocation8], %s187
        %s189 = sand.u32 %s72, 1
        %s190 = smul.addr %s189, 8
        %s191 = scalar_lea.vmem [#allocation7], %s190
        // Predicated region
        $region33: #{tpu_custom_call.1} parent=27 // pred_check
          %p192 = pneg %p85
        $region34: #{tpu_custom_call.1} parent=27 // pred_check_branch
          %194 = sbr.rel (%p192) target = $region36
        $region35: #{tpu_custom_call.1} parent=27 // pred_region
          %196 = dma.done %s188, 128
        $region36: #{tpu_custom_call.1} parent=27 // pred_fallthru
          _
        %s197 = sand.u32 %s44, 1
        %s198 = scalar_lea.sflag [#allocation5], %s197
        %s199 = sand.u32 %s44, 1
        %s200 = smul.addr %s199, 8
        %s201 = scalar_lea.vmem [#allocation4], %s200
        %p202 = pneg %p57
        %p203 = pneg %p54
        %s204 = sand.u32 %s72, 1
        %s205 = scalar_lea.sflag [#allocation8], %s204
        %s206 = sand.u32 %s72, 1
        %s207 = smul.addr %s206, 8
        %s208 = scalar_lea.vmem [#allocation7], %s207
        %p209 = pneg %p85
        %p210 = pneg %p82
        %p211 = pneg %p111
        %p212 = pneg %p108
        %s213 = sand.u32 %s98, 1
        %s214 = scalar_lea.sflag [#allocation6], %s213
        %s215 = sand.u32 %s98, 1
        %s216 = scalar_lea.vmem [#allocation9], %s215
        %p217 = scmp.eq.s32.totalorder %s27, 0
        // Predicated region
        $region37: #{tpu_custom_call.1} parent=27 // pred_check
          %p218 = pneg %p217
        $region38: #{tpu_custom_call.1} parent=27 // pred_check_branch
          %220 = sbr.rel (%p218) target = $region40
        $region39: #{tpu_custom_call.1} parent=27 // pred_region
          %221 = vst [vmem:[#allocation2] sm:$0xff] 0.0
          %222 = vst [vmem:[#allocation3] sm:$0xff] 0.0
        $region40: #{tpu_custom_call.1} parent=27 // pred_fallthru
          _
        %v223 = vld [vmem:[%s181] sm:$0xff]
        %v224 = vld [vmem:[%s191] sm:$0xff]
        %v225 = vmul.f32 %v223, %v224
        %v226 = vmul.f32 %v223, %v223
        %v227 = vmul.f32 %v224, %v224
        %v228 = vadd.f32 %v226, %v227
        %v229 = vld [vmem:[#allocation2] sm:$0xff]
        %v230 = vadd.f32 %v225, 0.0
        %v231 = vadd.f32 %v229, %v230
        %232 = vst [vmem:[#allocation2] sm:$0xff] %v231
        %v233 = vld [vmem:[#allocation3] sm:$0xff]
        %v234 = vadd.f32 %v228, 0.0
        %v235 = vadd.f32 %v233, %v234
        %236 = vst [vmem:[#allocation3] sm:$0xff] %v235
        // Predicated region
        $region41: #{tpu_custom_call.1} parent=27 // pred_check
          %p237 = pneg %p217
        $region42: #{tpu_custom_call.1} parent=27 // pred_check_branch
          %239 = sbr.rel (%p237) target = $region44
        $region43: #{tpu_custom_call.1} parent=27 // pred_region
          %v240 = vld [vmem:[#allocation2] sm:$0xff]
          %241 = vadd.xlane.f32.xlu0 %v240
          %v242 = vpop.xlane.xlu0 %241
          %v243 = vrot.slane %v242, 4
          %v244 = vadd.f32 %v242, %v243
          %v245 = vrot.slane %v244, 2
          %v246 = vadd.f32 %v244, %v245
          %v247 = vrot.slane %v246, 1
          %v248 = vadd.f32 %v246, %v247
          %s249 = vtos %v248
          %s250 = sadd.f32 %s249, 1.0
          %v251 = vld [vmem:[#allocation3] sm:$0xff]
          %252 = vadd.xlane.f32.xlu0 %v251
          %v253 = vpop.xlane.xlu0 %252
          %v254 = vrot.slane %v253, 4
          %v255 = vadd.f32 %v253, %v254
          %v256 = vrot.slane %v255, 2
          %v257 = vadd.f32 %v255, %v256
          %v258 = vrot.slane %v257, 1
          %v259 = vadd.f32 %v257, %v258
          %s260 = vtos %v259
          %s261 = sadd.f32 %s260, 1.0
          %v262 = vstv %s261
          %v263 = vrcp.pop %v262
          %v264 = vmul.f32 %v262, %v263
          %v265 = vsub.f32 1.0, %v264
          %v266 = vmul.f32 %v263, %v265
          %v267 = vadd.f32 %v263, %v266
          %vm268 = vweird.f32 %v262
          %vm269 = vweird.f32 %v263
          %vm270 = vmor %vm268, %vm269
          %v271 = vsel %vm270, %v263, %v267
          %v272 = vand.u32 2147483647, %v262
          %vm273 = vcmp.eq.f32.partialorder %v272, 8.507059e+37
          %v274 = vand.u32 %v262, 2147483648
          %v275 = vor.u32 1.1754944e-38, %v274
          %v276 = vsel %vm273, %v275, %v271
          %s277 = vtos %v276
          %s278 = smul.f32 %s250, %s277
          %s279 = ssub.f32 1.0, %s278
          %v280 = vstv %s279
          %281 = vst [vmem:[%s216] sm:$0x1] %v280
        $region44: #{tpu_custom_call.1} parent=27 // pred_fallthru
          _
        %s282 = sand.u32 %s98, 1
        %s283 = scalar_lea.sflag [#allocation6], %s282
        %s284 = sand.u32 %s98, 1
        %s285 = scalar_lea.vmem [#allocation9], %s284
        // Predicated region
        $region45: #{tpu_custom_call.1} parent=27 // pred_check
          %p286 = pneg %p108
        $region46: #{tpu_custom_call.1} parent=27 // pred_check_branch
          %288 = sbr.rel (%p286) target = $region48
        $region47: #{tpu_custom_call.1} parent=27 // pred_region
          %290 = vsyncadd %s283, 0
          %s291 = scalar_lea.hbm %s2, %s26
          %s293 = sshll.u32 %s285, 4
          %s294 = int_to_ptr.vmem [resolvable:$true] %s293
          %s295 = sshll.u32 %s291, 4
          %s296 = int_to_ptr.hbm [resolvable:$true] %s295
          %298 = dma.vmem_to_hbm [thread:$0]  %s294, 16, %s296, %s283
        $region48: #{tpu_custom_call.1} parent=27 // pred_fallthru
          _
      $region28: #{tpu_custom_call.1} parent=5 // pred_fallthru
        _
      %p299 = scmp.le.s32.totalorder 2, %s17
      // Predicated region
      $region49: #{tpu_custom_call.1} parent=5 // pred_check
        %p300 = pneg %p299
      $region50: #{tpu_custom_call.1} parent=5 // pred_check_branch
        %302 = sbr.rel (%p300) target = $region52
      $region51: #{tpu_custom_call.1} parent=5 // pred_region
        %s303 = ssub.s32 %s17, 2
        // Predicated region
        $region53: #{tpu_custom_call.1} parent=51 // pred_check
          %p304 = pneg %p114
        $region54: #{tpu_custom_call.1} parent=51 // pred_check_branch
          %306 = sbr.rel (%p304) target = $region56
        $region55: #{tpu_custom_call.1} parent=51 // pred_region
          %s307 = sand.u32 %s99, 1
          %s308 = scalar_lea.sflag [#allocation6], %s307
          %s309 = sand.u32 %s99, 1
          %s310 = scalar_lea.vmem [#allocation9], %s309
          %312 = dma.done %s308, 16
        $region56: #{tpu_custom_call.1} parent=51 // pred_fallthru
          _
      $region52: #{tpu_custom_call.1} parent=5 // pred_fallthru
        _
    $region6: #{tpu_custom_call.1} parent=1 // loop_footer
      %s21 = sadd.s32 1, %s17
    $region7: #{tpu_custom_call.1} parent=1 // loop_footer_branch
      %16 = sbr.rel target = $region3
    $region8: #{tpu_custom_call.1} parent=1 // loop_exit
      _
    %313 = vsyncpa [#allocation5], 1
    %s314 = scalar_lea.sflag [#allocation5], 1
    %315 = vsyncpa %s314, 1
    %316 = vsyncpa [#allocation8], 1
    %s317 = scalar_lea.sflag [#allocation8], 1
    %318 = vsyncpa %s317, 1
    %319 = vsyncpa [#allocation6], 1
    %s320 = scalar_lea.sflag [#allocation6], 1
    %321 = vsyncpa %s320, 1

</llo_original>
